<compile_context>
chip_gen: v5e
topology: v5e:2x2
jax: 0.10.0
libtpu: 0.0.40
codegen_flags: <defaults>
</compile_context>

<pallas_src>
import jax
import jax.numpy as jnp
from jax.experimental import pallas as pl
from jax.experimental.pallas import tpu as pltpu


_LANES = 128
_F32_SUBLANES = 8


def _round_up(x, m):
    return ((x + m - 1) // m) * m


def _device_kind():
    try:
        return jax.devices()[0].device_kind.lower()
    except Exception:
        return ""


def _num_tensorcores(kind):
    # v7x has 2 TensorCores per chip (a "parallel" grid axis shards across them);
    # v5e / v6e have a single TensorCore, where an extra core axis only serializes.
    return 2 if "7" in kind else 1


def _target_block_bytes(kind):
    # Bytes per input per pipeline buffer.
    if "7" in kind:
        return 2 << 20      # v7x: 3.2 TB/s HBM -> 2 MiB amortizes the ~0.35us step cost
    if "v6" in kind:
        return 2 << 20      # v6e: 1-4 MiB blocks sit at ~85% of HBM roofline
    if "v5" in kind:
        return 1 << 20      # v5e: already BW-bound at <=1 MiB; stay far under 16 MiB scoped VMEM
    return 512 << 10        # unknown / older parts: conservative


def _sublane_multiple(dtype):
    # Native TPU tile second-minor dim: 8 for 4-byte, 16 for 2-byte, 32 for 1-byte dtypes.
    return max(_F32_SUBLANES, 32 // jnp.dtype(dtype).itemsize)


def ae_loss(model_output, input_modalities, lengths=None):
    """Pallas equivalent of AELoss.forward: mean((model_output - input_modalities[1])**2)."""
    del lengths  # unused, same as the PyTorch module
    target = input_modalities[1]
    assert model_output.shape == target.shape

    total = int(model_output.size)
    if total == 0:
        # torch.nn.MSELoss returns nan on empty input; avoid a 0-sized pallas_call.
        return jnp.float32(jnp.nan)

    kind = _device_kind()
    num_cores = _num_tensorcores(kind)

    sub_mult = max(_sublane_multiple(model_output.dtype), _sublane_multiple(target.dtype))
    itemsize = max(jnp.dtype(model_output.dtype).itemsize, jnp.dtype(target.dtype).itemsize)

    # ---- lane-dense (rows, 128) view; zero-copy whenever total % 128 == 0 ----
    rows = pl.cdiv(total, _LANES)
    lane_pad = rows * _LANES - total

    def to_slab(x):
        flat = x.reshape(-1)                 # free (bitcast) reshape, native dtype kept
        if lane_pad:
            # TODO(synk): a <128-element tail still forces a full-array pad copy;
            # a fully zero-copy ragged-lane path would need 1-D blocks plus
            # element-level masking, which Mosaic 1-D layouts don't handle cleanly.
            flat = jnp.pad(flat, (0, lane_pad))   # identical zero-pad -> diff == 0 there
        return flat.reshape(rows, _LANES)

    pred2d = to_slab(model_output)
    tgt2d = to_slab(target)

    # ---- block / grid sizing: split *blocks* (not rows) between cores ----
    block_rows_cap = max(
        sub_mult,
        (_target_block_bytes(kind) // (_LANES * itemsize)) // sub_mult * sub_mult,
    )
    block_rows = min(_round_up(rows, sub_mult), block_rows_cap)
    total_blocks = pl.cdiv(rows, block_rows)
    blocks_per_core = pl.cdiv(total_blocks, num_cores)

    # The last block may be ragged (rows % block_rows != 0) and, on a 2-core split,
    # a core may own a dead trailing step; both are masked against the true row
    # count. Whether any masking code is needed at all is decided at trace time.
    has_dead_steps = num_cores * blocks_per_core != total_blocks
    needs_mask = (total_blocks * block_rows != rows) or has_dead_steps

    if has_dead_steps:
        # Clamp dead grid steps onto the last real block (their contribution is
        # masked to zero in the kernel) so no out-of-bounds DMA is ever issued.
        def in_map(c, j):
            return (jnp.minimum(c * blocks_per_core + j, total_blocks - 1), 0)
    else:
        def in_map(c, j):
            return (c * blocks_per_core + j, 0)

    def sse_kernel(pred_ref, tgt_ref, out_ref, acc_ref):
        c = pl.program_id(0)
        j = pl.program_id(1)

        @pl.when(j == 0)
        def _():
            acc_ref[...] = jnp.zeros_like(acc_ref)

        diff = pred_ref[...].astype(jnp.float32) - tgt_ref[...].astype(jnp.float32)
        sq = diff * diff

        if needs_mask:
            # Mask rows past the true extent (ragged last block / dead steps).
            # Garbage in the OOB part of the VMEM tile (even NaN/Inf) is discarded
            # by the select, so the sum stays exact.
            row0 = (c * blocks_per_core + j) * block_rows
            row_ids = row0 + jax.lax.broadcasted_iota(jnp.int32, (block_rows, _LANES), 0)
            sq = jnp.where(row_ids < rows, sq, 0.0)

        # (block_rows,128) -> (block_rows//8, 8, 128); summing the leading axis is
        # pure vreg (VPU) adds; the single cross-lane (XLU) reduce happens once in
        # the finalize branch.  f32 accumulation; fine for typical loss sizes.
        acc_ref[...] += sq.reshape(-1, _F32_SUBLANES, _LANES).sum(axis=0)

        @pl.when(j == pl.num_programs(1) - 1)
        def _():
            out_ref[0, 0] = jnp.sum(acc_ref[...])

    bytes_accessed = (
        total * jnp.dtype(model_output.dtype).itemsize
        + total * jnp.dtype(target.dtype).itemsize
        + num_cores * 4
    )

    partials = pl.pallas_call(
        sse_kernel,
        out_shape=jax.ShapeDtypeStruct((num_cores, 1), jnp.float32),
        grid_spec=pltpu.PrefetchScalarGridSpec(
            num_scalar_prefetch=0,
            grid=(num_cores, blocks_per_core),
            in_specs=[
                pl.BlockSpec((block_rows, _LANES), in_map),
                pl.BlockSpec((block_rows, _LANES), in_map),
            ],
            out_specs=pl.BlockSpec(
                (1, 1), lambda c, j: (c, 0), memory_space=pltpu.SMEM
            ),
            scratch_shapes=[pltpu.VMEM((_F32_SUBLANES, _LANES), jnp.float32)],
        ),
        compiler_params=pltpu.CompilerParams(
            dimension_semantics=("parallel", "arbitrary"),
        ),
        cost_estimate=pl.CostEstimate(
            flops=3 * total, transcendentals=0, bytes_accessed=bytes_accessed
        ),
    )(pred2d, tgt2d)

    # Mean over the true element count (padding / masked rows contributed exactly 0).
    return jnp.sum(partials) / jnp.float32(total)


if __name__ == "__main__":
    key = jax.random.PRNGKey(0)
    k1, k2, k3 = jax.random.split(key, 3)

    # Small shapes consistent with the forward: model_output and
    # input_modalities[1] share a shape; input_modalities[0] / lengths unused.
    shape = (2, 4, 16, 16)  # NCHW, 2048 elements (lane-aligned -> zero-copy path)
    model_output = jax.random.normal(k1, shape, dtype=jnp.float32)
    modality0 = jax.random.normal(k2, shape, dtype=jnp.float32)  # unused by loss
    modality1 = jax.random.normal(k3, shape, dtype=jnp.float32)
    input_modalities = [modality0, modality1]
    lengths = jnp.full((shape[0],), shape[2], dtype=jnp.int32)

    loss = ae_loss(model_output, input_modalities, lengths)
    loss = jax.block_until_ready(loss)
    ref = jnp.mean((model_output - modality1) ** 2)
    assert jnp.allclose(loss, ref, rtol=1e-5, atol=1e-6), (loss, ref)

    # Also exercise the non-lane-aligned / ragged-block masking path.
    k4, k5 = jax.random.split(k1)
    shape2 = (3, 5, 7, 11)  # 1155 elements: not a multiple of 128
    a = jax.random.normal(k4, shape2, dtype=jnp.float32)
    b = jax.random.normal(k5, shape2, dtype=jnp.float32)
    loss2 = jax.block_until_ready(ae_loss(a, [a, b], None))
    ref2 = jnp.mean((a - b) ** 2)
    assert jnp.allclose(loss2, ref2, rtol=1e-5, atol=1e-6), (loss2, ref2)

    print("KERNEL_OK")
</pallas_src>

<mosaic_0001>
module attributes {stable_mosaic.version = 11 : i64} {
  func.func @sse_kernel(%arg0: i32, %arg1: i32, %arg2: memref<16x128xf32, #tpu.memory_space<vmem>>, %arg3: memref<16x128xf32, #tpu.memory_space<vmem>>, %arg4: memref<1x1xf32, #tpu.memory_space<smem>>, %arg5: memref<8x128xf32, #tpu.memory_space<vmem>>) attributes {dimension_semantics = [#tpu.dimension_semantics<parallel>, #tpu.dimension_semantics<arbitrary>], iteration_bounds = array<i64: 1, 1>, scalar_prefetch = 0 : i64, scratch_operands = 1 : i64, tpu.core_type = #tpu.core_type<tc>, window_params = [{transform_indices = @transform_0, window_bounds = array<i64: 16, 128>}, {transform_indices = @transform_1, window_bounds = array<i64: 16, 128>}, {transform_indices = @transform_2, window_bounds = array<i64: 1, 1>}]} {
    %c0_i32 = arith.constant 0 : i32
    %0 = arith.cmpi eq, %arg1, %c0_i32 : i32
    %1 = arith.extui %0 : i1 to i32
    %c0_i32_0 = arith.constant 0 : i32
    %2 = arith.cmpi ne, %1, %c0_i32_0 : i32
    scf.if %2 {
      %cst_10 = arith.constant 0.000000e+00 : f32
      %15 = vector.broadcast %cst_10 : f32 to vector<8x128xf32>
      %c0_11 = arith.constant 0 : index
      %c0_12 = arith.constant 0 : index
      %16 = vector.load %arg5[%c0_11, %c0_12] : memref<8x128xf32, #tpu.memory_space<vmem>>, vector<8x128xf32>
      tpu.vector_store %arg5[%c0_11, %c0_12], %15 {strides = array<i32>} : memref<8x128xf32, #tpu.memory_space<vmem>>, vector<8x128xf32>,
    } else {
    }
    %c0 = arith.constant 0 : index
    %c0_1 = arith.constant 0 : index
    %3 = vector.load %arg2[%c0, %c0_1] : memref<16x128xf32, #tpu.memory_space<vmem>>, vector<16x128xf32>
    %c0_2 = arith.constant 0 : index
    %c0_3 = arith.constant 0 : index
    %4 = vector.load %arg3[%c0_2, %c0_3] : memref<16x128xf32, #tpu.memory_space<vmem>>, vector<16x128xf32>
    %5 = arith.subf %3, %4 : vector<16x128xf32>
    %6 = arith.mulf %5, %5 : vector<16x128xf32>
    %c0_4 = arith.constant 0 : index
    %c0_5 = arith.constant 0 : index
    %7 = vector.load %arg5[%c0_4, %c0_5] : memref<8x128xf32, #tpu.memory_space<vmem>>, vector<8x128xf32>
    %8 = vector.shape_cast %6 : vector<16x128xf32> to vector<2x8x128xf32>
    %cst = arith.constant dense<0.000000e+00> : vector<8x128xf32>
    %9 = vector.multi_reduction <add>, %8, %cst [0] : vector<2x8x128xf32> to vector<8x128xf32>
    %10 = arith.addf %7, %9 : vector<8x128xf32>
    %c0_6 = arith.constant 0 : index
    %c0_7 = arith.constant 0 : index
    %11 = vector.load %arg5[%c0_6, %c0_7] : memref<8x128xf32, #tpu.memory_space<vmem>>, vector<8x128xf32>
    tpu.vector_store %arg5[%c0_6, %c0_7], %10 {strides = array<i32>} : memref<8x128xf32, #tpu.memory_space<vmem>>, vector<8x128xf32>,
    %c0_i32_8 = arith.constant 0 : i32
    %12 = arith.cmpi eq, %arg1, %c0_i32_8 : i32
    %13 = arith.extui %12 : i1 to i32
    %c0_i32_9 = arith.constant 0 : i32
    %14 = arith.cmpi ne, %13, %c0_i32_9 : i32
    scf.if %14 {
      %c0_10 = arith.constant 0 : index
      %c0_11 = arith.constant 0 : index
      %15 = vector.load %arg5[%c0_10, %c0_11] : memref<8x128xf32, #tpu.memory_space<vmem>>, vector<8x128xf32>
      %16 = vector.shape_cast %15 : vector<8x128xf32> to vector<1x8x128xf32>
      %cst_12 = arith.constant dense<0.000000e+00> : vector<1xf32>
      %17 = vector.multi_reduction <add>, %16, %cst_12 [1, 2] : vector<1x8x128xf32> to vector<1xf32>
      %18 = vector.shape_cast %17 : vector<1xf32> to vector<1x1x1xf32>
      %19 = vector.extract %18[0, 0, 0] : f32 from vector<1x1x1xf32>
      %c0_13 = arith.constant 0 : index
      %c0_14 = arith.constant 0 : index
      %20 = memref.load %arg4[%c0_13, %c0_14] : memref<1x1xf32, #tpu.memory_space<smem>>
      memref.store %19, %arg4[%c0_13, %c0_14] : memref<1x1xf32, #tpu.memory_space<smem>>
    } else {
    }
    return
  }
  func.func @transform_0(%arg0: i32, %arg1: i32) -> (i32, i32) {
    %c1_i32 = arith.constant 1 : i32
    %0 = arith.muli %arg0, %c1_i32 : i32
    %1 = arith.addi %0, %arg1 : i32
    %c0_i32 = arith.constant 0 : i32
    %c0_i32_0 = arith.constant 0 : i32
    return %1, %c0_i32 : i32, i32
  }
  func.func @transform_1(%arg0: i32, %arg1: i32) -> (i32, i32) {
    %c1_i32 = arith.constant 1 : i32
    %0 = arith.muli %arg0, %c1_i32 : i32
    %1 = arith.addi %0, %arg1 : i32
    %c0_i32 = arith.constant 0 : i32
    %c0_i32_0 = arith.constant 0 : i32
    return %1, %c0_i32 : i32, i32
  }
  func.func @transform_2(%arg0: i32, %arg1: i32) -> (i32, i32) {
    %c0_i32 = arith.constant 0 : i32
    %c0_i32_0 = arith.constant 0 : i32
    return %arg0, %c0_i32 : i32, i32
  }
}

</mosaic_0001>

<llo_original>
// kernel: tpu_custom_call.1
$region0: #{tpu_custom_call.1}
  #allocation0 [shape = 'u32[]', space=smem, size = 0x4, offset = 0x4, fixed_abs, tag = 'smem constant byte address 0x4 - core index']
  #allocation1 [shape = 'u32[72,128]{1,0:T(1,128)}', space=vmem, size = 0x9000, scoped, tag = 'internal scratch']
  #allocation2 [shape = 'f32[8,128]{1,0:T(8,128)}', space=vmem, size = 0x1000, scoped, tag = 'scratch operand']
  %s0 = inlined_call_operand.hbm [shape: f32[16,128], index: 0, kind: input, shape index: {}]
  %s1 = inlined_call_operand.hbm [shape: f32[16,128], index: 1, kind: input, shape index: {}]
  %s2 = inlined_call_operand.hbm [shape: f32[1,1], index: 2, kind: output, shape index: {}]
  %s3 = sld [smem:[#allocation0]]
  $region34: #{tpu_custom_call.1} parent=0
    _
  %s5 = ssub.s32 1, %s3
  %s6 = scalar_select 0, %s5, %s3
  $region1: #{tpu_custom_call.1} parent=0
    #allocation3 [shape = 'u8[8192]{0}', space=vmem, size = 0x2000, scoped, tag = 'input window, operand 0, single buffered']
    #allocation4 [shape = 's32[1]{0}', space=sflag, size = 0x4, scoped, tag = 'scoped memory for tpu_custom_call.1']
    #allocation5 [shape = 's32[1]{0}', space=sflag, size = 0x4, scoped, tag = 'scoped memory for tpu_custom_call.1']
    #allocation6 [shape = 'u8[8192]{0}', space=vmem, size = 0x2000, scoped, tag = 'input window, operand 1, single buffered']
    #allocation7 [shape = 's32[1]{0}', space=sflag, size = 0x4, scoped, tag = 'scoped memory for tpu_custom_call.1']
    #allocation8 [shape = 'u8[512]{0}', space=smem, size = 0x200, scoped, tag = 'output window, operand 0, single buffered']
    %7 = vsyncpa [#allocation4], 0
    %8 = vsyncpa [#allocation7], 0
    %9 = vsyncpa [#allocation5], 0
    // Predicated region
    $region2: #{tpu_custom_call.1} parent=1 // pred_check
      _
    $region3: #{tpu_custom_call.1} parent=1 // pred_check_branch
      %11 = sbr.rel (0) target = $region5
    $region4: #{tpu_custom_call.1} parent=1 // pred_region
      %s12 = sadd.s32 0, 0
      %s13 = smul.u32 2, %s12
      %15 = vsyncadd [#allocation4], 0
      %s16 = smul.addr %s13, 8
      %s17 = scalar_lea.hbm %s0, %s16
      %s18 = sshll.u32 %s17, 4
      %s19 = int_to_ptr.hbm [resolvable:$true] %s18
      %s20 = sshll.u32 [#allocation3], 4
      %s21 = int_to_ptr.vmem [resolvable:$true] %s20
      %26 = dma.hbm_to_vmem [thread:$0]  %s19, 256, %s21, [#allocation4], 128, 128, 8
    $region5: #{tpu_custom_call.1} parent=1 // pred_fallthru
      _
    // Predicated region
    $region6: #{tpu_custom_call.1} parent=1 // pred_check
      _
    $region7: #{tpu_custom_call.1} parent=1 // pred_check_branch
      %28 = sbr.rel (0) target = $region9
    $region8: #{tpu_custom_call.1} parent=1 // pred_region
      %s29 = sadd.s32 0, 0
      %s30 = smul.u32 2, %s29
      %32 = vsyncadd [#allocation7], 0
      %s33 = smul.addr %s30, 8
      %s34 = scalar_lea.hbm %s1, %s33
      %s35 = sshll.u32 %s34, 4
      %s36 = int_to_ptr.hbm [resolvable:$true] %s35
      %s37 = sshll.u32 [#allocation6], 4
      %s38 = int_to_ptr.vmem [resolvable:$true] %s37
      %43 = dma.hbm_to_vmem [thread:$0]  %s36, 256, %s38, [#allocation7], 128, 128, 8
    $region9: #{tpu_custom_call.1} parent=1 // pred_fallthru
      _
    // Predicated region
    $region10: #{tpu_custom_call.1} parent=1 // pred_check
      _
    $region11: #{tpu_custom_call.1} parent=1 // pred_check_branch
      %45 = sbr.rel (0) target = $region13
    $region12: #{tpu_custom_call.1} parent=1 // pred_region
      %47 = dma.done [#allocation4], 256
    $region13: #{tpu_custom_call.1} parent=1 // pred_fallthru
      _
    // Predicated region
    $region14: #{tpu_custom_call.1} parent=1 // pred_check
      _
    $region15: #{tpu_custom_call.1} parent=1 // pred_check_branch
      %49 = sbr.rel (0) target = $region17
    $region16: #{tpu_custom_call.1} parent=1 // pred_region
      %51 = dma.done [#allocation7], 256
    $region17: #{tpu_custom_call.1} parent=1 // pred_fallthru
      _
    %s52 = sadd.s32 0, 0
    %s53 = smul.u32 2, %s52
    %s54 = sadd.s32 0, 0
    %s55 = smul.u32 2, %s54
    %p56 = scmp.eq.s32.totalorder 0, 0
    // Predicated region
    $region18: #{tpu_custom_call.1} parent=1 // pred_check
      %p57 = pneg %p56
    $region19: #{tpu_custom_call.1} parent=1 // pred_check_branch
      %59 = sbr.rel (%p57) target = $region21
    $region20: #{tpu_custom_call.1} parent=1 // pred_region
      %60 = vst [vmem:[#allocation2] sm:$0xff] 0.0
    $region21: #{tpu_custom_call.1} parent=1 // pred_fallthru
      _
    %v61 = vld [vmem:[#allocation3] sm:$0xff]
    %v62 = vld [vmem:[#allocation3 + $0x8] sm:$0xff]
    %v63 = vld [vmem:[#allocation6] sm:$0xff]
    %v64 = vld [vmem:[#allocation6 + $0x8] sm:$0xff]
    %v65 = vsub.f32 %v61, %v63
    %v66 = vsub.f32 %v62, %v64
    %v67 = vmul.f32 %v65, %v65
    %v68 = vmul.f32 %v66, %v66
    %v69 = vld [vmem:[#allocation2] sm:$0xff]
    %v70 = vadd.f32 %v67, %v68
    %v71 = vadd.f32 %v69, %v70
    %72 = vst [vmem:[#allocation2] sm:$0xff] %v71
    // Predicated region
    $region22: #{tpu_custom_call.1} parent=1 // pred_check
      %p73 = pneg %p56
    $region23: #{tpu_custom_call.1} parent=1 // pred_check_branch
      %75 = sbr.rel (%p73) target = $region25
    $region24: #{tpu_custom_call.1} parent=1 // pred_region
      %v76 = vld [vmem:[#allocation2] sm:$0xff]
      %77 = vadd.xlane.f32.xlu0 %v76
      %v78 = vpop.xlane.xlu0 %77
      %v79 = vrot.slane %v78, 4
      %v80 = vadd.f32 %v78, %v79
      %v81 = vrot.slane %v80, 2
      %v82 = vadd.f32 %v80, %v81
      %v83 = vrot.slane %v82, 1
      %v84 = vadd.f32 %v82, %v83
      %s85 = vtos %v84
      %s86 = scalar_lea.smem [#allocation8], 0
      %87 = sst [smem:[%s86]] %s85
    $region25: #{tpu_custom_call.1} parent=1 // pred_fallthru
      _
    // Predicated region
    $region26: #{tpu_custom_call.1} parent=1 // pred_check
      _
    $region27: #{tpu_custom_call.1} parent=1 // pred_check_branch
      %89 = sbr.rel (0) target = $region29
    $region28: #{tpu_custom_call.1} parent=1 // pred_region
      %91 = vsyncadd [#allocation5], 0
      %s93 = sshll.u32 %s2, 4
      %s94 = int_to_ptr.hbm [resolvable:$true] %s93
      %96 = dma.smem_to_hbm [#allocation8], 16, %s94, [#allocation5]
    $region29: #{tpu_custom_call.1} parent=1 // pred_fallthru
      _
    // Predicated region
    $region30: #{tpu_custom_call.1} parent=1 // pred_check
      _
    $region31: #{tpu_custom_call.1} parent=1 // pred_check_branch
      %98 = sbr.rel (0) target = $region33
    $region32: #{tpu_custom_call.1} parent=1 // pred_region
      %100 = dma.done [#allocation5], 16
    $region33: #{tpu_custom_call.1} parent=1 // pred_fallthru
      _
    %101 = sfence
    %102 = vsyncpa [#allocation4], 1
    %103 = vsyncpa [#allocation7], 1
    %104 = vsyncpa [#allocation5], 1

</llo_original>
